<compile_context>
chip_gen: v7x
topology: tpu7x:2x2x1
jax: 0.10.0
libtpu: 0.0.40
codegen_flags: <defaults>
</compile_context>

<pallas_src>
import functools
import math

import jax
import jax.numpy as jnp
from jax import lax
from jax.experimental import pallas as pl
from jax.experimental.pallas import tpu as pltpu


# ---------------------------------------------------------------------------
# Kernels
# ---------------------------------------------------------------------------
def _pe_add_kernel(x_ref, pos_ref, out_ref):
    # x_ref: (ts, B, E); pos_ref: (ts, 1, E) -> broadcast over the batch (sublane) dim.
    out_ref[...] = (x_ref[...] + pos_ref[...]).astype(out_ref.dtype)


def _lsr16(v):
    # Exact logical-right-shift-by-16 on int32 (arithmetic shift + mask of the low half).
    return jnp.bitwise_and(jnp.right_shift(v, 16), 0xFFFF)


def _pe_add_dropout_kernel(seed_ref, x_ref, pos_ref, out_ref, *, rate, blk_s, batch, emb):
    # seed_ref: (1,) int32 scalar-prefetch (SMEM).
    summed = x_ref[...] + pos_ref[...]            # (ts, B, E), in x dtype
    shape = summed.shape

    # Global linear element index (unique across tiles) -> counter-based hash.
    s_idx = lax.broadcasted_iota(jnp.int32, shape, 0) + pl.program_id(0) * blk_s
    b_idx = lax.broadcasted_iota(jnp.int32, shape, 1)
    e_idx = lax.broadcasted_iota(jnp.int32, shape, 2)
    h = (s_idx * batch + b_idx) * emb + e_idx
    h = h ^ seed_ref[0]
    # Integer finalizer (Mueller hash32): good avalanche, only VPU int ops.
    h = (_lsr16(h) ^ h) * jnp.int32(0x45D9F3B)
    h = (_lsr16(h) ^ h) * jnp.int32(0x45D9F3B)
    h = _lsr16(h) ^ h

    # Sign-safe raw-integer threshold compare: keep with probability (1 - rate).
    v = jnp.bitwise_and(h, 0x7FFFFFFF)            # uniform in [0, 2^31)
    thresh = jnp.int32(min(int(round(rate * 2147483648.0)), 2147483647))
    keep = v >= thresh

    scale = jnp.asarray(1.0 / (1.0 - rate), dtype=summed.dtype)
    out_ref[...] = jnp.where(keep, summed * scale,
                             jnp.zeros_like(summed)).astype(out_ref.dtype)


# ---------------------------------------------------------------------------
# Module-equivalent wrapper
# ---------------------------------------------------------------------------
def make_pos_embedding(emb_size, maxlen=5000, dtype=jnp.float32):
    """Builds the PositionalEncoding buffer exactly like the PyTorch __init__."""
    den = jnp.exp(
        -jnp.arange(0, emb_size, 2, dtype=jnp.float32) * (math.log(10000.0) / emb_size)
    )
    pos = jnp.arange(0, maxlen, dtype=jnp.float32)[:, None]
    pe = jnp.zeros((maxlen, emb_size), dtype=jnp.float32)
    pe = pe.at[:, 0::2].set(jnp.sin(pos * den))
    pe = pe.at[:, 1::2].set(jnp.cos(pos * den[: emb_size // 2]))
    return pe[:, None, :].astype(dtype)  # (maxlen, 1, emb_size)


def positional_encoding(x, pos_embedding, *, dropout_rate=0.0, training=False, seed=0):
    """out = dropout(x + pos_embedding[:S]);  x: (S, B, E), pos_embedding: (maxlen, 1, E)."""
    S, B, E = x.shape
    maxlen = pos_embedding.shape[0]
    assert S <= maxlen, "sequence length exceeds maxlen of the positional table"
    pos = pos_embedding[:S]                              # (S, 1, E)
    if pos.dtype != x.dtype:
        pos = pos.astype(x.dtype)

    itemsize = x.dtype.itemsize
    # Total double-buffered VMEM per step ~= 2*x + 2*out + 2*pos_padded; budget ~24 MiB
    # (fits the explicit 32 MiB limit on v5e/v6e and v7x's 64 MiB physical VMEM).
    pad_rows = 8 * max(1, 4 // itemsize)                 # size-1 batch dim pads to a full sublane tile
    per_row = 2 * (2 * B * E * itemsize) + 2 * (pad_rows * E * itemsize)
    ts = max(1, min(S, (24 * 1024 * 1024) // max(1, per_row)))
    if ts < S:
        ts = max(8, (ts // 8) * 8)                       # tidy sublane-aligned DMA rows
    elif S >= 16:
        half = -(-((S + 1) // 2) // 8) * 8               # round half up to a multiple of 8
        if half < S:
            ts = half                                    # >=2 parallel steps: both v7x TCs get work
    grid = (pl.cdiv(S, ts),)

    compiler_params = pltpu.CompilerParams(
        dimension_semantics=("parallel",),
        vmem_limit_bytes=32 * 1024 * 1024,
    )
    cost = pl.CostEstimate(
        flops=2 * S * B * E,
        transcendentals=0,
        bytes_accessed=(2 * S * B * E + S * E) * itemsize,
    )
    out_shape = jax.ShapeDtypeStruct((S, B, E), x.dtype)

    if (not training) or dropout_rate <= 0.0:
        # Eval / p==0: dropout is the identity -> pure vectorized add.
        grid_spec = pltpu.PrefetchScalarGridSpec(
            num_scalar_prefetch=0,
            grid=grid,
            in_specs=[
                pl.BlockSpec((ts, B, E), lambda i: (i, 0, 0)),
                pl.BlockSpec((ts, 1, E), lambda i: (i, 0, 0)),
            ],
            out_specs=pl.BlockSpec((ts, B, E), lambda i: (i, 0, 0)),
        )
        return pl.pallas_call(
            _pe_add_kernel,
            out_shape=out_shape,
            grid_spec=grid_spec,
            compiler_params=compiler_params,
            cost_estimate=cost,
        )(x, pos)

    if dropout_rate >= 1.0:
        return jnp.zeros((S, B, E), x.dtype)

    # Training: in-kernel dropout from a counter-based hash (portable, no TPU-only PRNG).
    seed_arr = jnp.asarray([seed], dtype=jnp.int32)
    grid_spec = pltpu.PrefetchScalarGridSpec(
        num_scalar_prefetch=1,
        grid=grid,
        in_specs=[
            pl.BlockSpec((ts, B, E), lambda i, seed_ref: (i, 0, 0)),
            pl.BlockSpec((ts, 1, E), lambda i, seed_ref: (i, 0, 0)),
        ],
        out_specs=pl.BlockSpec((ts, B, E), lambda i, seed_ref: (i, 0, 0)),
    )
    kernel = functools.partial(
        _pe_add_dropout_kernel,
        rate=float(dropout_rate), blk_s=ts, batch=B, emb=E,
    )
    return pl.pallas_call(
        kernel,
        out_shape=out_shape,
        grid_spec=grid_spec,
        compiler_params=compiler_params,
        cost_estimate=cost,
    )(seed_arr, x, pos)


# ---------------------------------------------------------------------------
# Demo / self-check
# ---------------------------------------------------------------------------
if __name__ == "__main__":
    key = jax.random.PRNGKey(0)

    emb_size = 128
    maxlen = 64
    seq, batch = 32, 8
    dropout = 0.1

    pos_embedding = make_pos_embedding(emb_size, maxlen)             # (maxlen, 1, E)
    x = jax.random.normal(key, (seq, batch, emb_size), dtype=jnp.float32)

    # --- eval mode (dropout == identity): exact check against plain JAX ---
    out = positional_encoding(x, pos_embedding, dropout_rate=dropout, training=False)
    out = jax.block_until_ready(out)
    ref = x + pos_embedding[:seq]
    assert out.shape == (seq, batch, emb_size)
    assert out.dtype == jnp.float32
    assert jnp.allclose(out, ref, atol=1e-6, rtol=1e-6)

    # --- training mode (in-kernel dropout): structural / statistical checks ---
    # TODO(synk): dropout cannot reproduce torch's RNG stream bit-for-bit; we verify the
    # semantics instead (kept elements equal ref/(1-p), dropped elements are exactly 0).
    out_tr = positional_encoding(
        x, pos_embedding, dropout_rate=dropout, training=True, seed=123)
    out_tr = jax.block_until_ready(out_tr)
    assert out_tr.shape == (seq, batch, emb_size)
    kept = out_tr != 0.0
    assert bool(jnp.all(jnp.where(kept,
                                  jnp.abs(out_tr * (1.0 - dropout) - ref) < 1e-4,
                                  True)))
    keep_frac = float(jnp.mean(kept.astype(jnp.float32)))
    assert 0.83 < keep_frac < 0.97, f"unexpected keep fraction {keep_frac}"

    print("KERNEL_OK")
</pallas_src>

<mosaic_0001>
module attributes {stable_mosaic.version = 11 : i64} {
  func.func @_pe_add_kernel(%arg0: i32, %arg1: memref<16x8x128xf32, #tpu.memory_space<vmem>>, %arg2: memref<16x1x128xf32, #tpu.memory_space<vmem>>, %arg3: memref<16x8x128xf32, #tpu.memory_space<vmem>>) attributes {dimension_semantics = [#tpu.dimension_semantics<parallel>], iteration_bounds = array<i64: 2>, scalar_prefetch = 0 : i64, scratch_operands = 0 : i64, tpu.core_type = #tpu.core_type<tc>, window_params = [{transform_indices = @transform_0, window_bounds = array<i64: 16, 8, 128>}, {transform_indices = @transform_1, window_bounds = array<i64: 16, 1, 128>}, {transform_indices = @transform_2, window_bounds = array<i64: 16, 8, 128>}]} {
    %c0 = arith.constant 0 : index
    %c0_0 = arith.constant 0 : index
    %c0_1 = arith.constant 0 : index
    %0 = vector.load %arg1[%c0, %c0_0, %c0_1] : memref<16x8x128xf32, #tpu.memory_space<vmem>>, vector<16x8x128xf32>
    %c0_2 = arith.constant 0 : index
    %c0_3 = arith.constant 0 : index
    %c0_4 = arith.constant 0 : index
    %1 = vector.load %arg2[%c0_2, %c0_3, %c0_4] : memref<16x1x128xf32, #tpu.memory_space<vmem>>, vector<16x1x128xf32>
    %2 = vector.broadcast %1 : vector<16x1x128xf32> to vector<16x8x128xf32>
    %3 = arith.addf %0, %2 : vector<16x8x128xf32>
    %c0_5 = arith.constant 0 : index
    %c0_6 = arith.constant 0 : index
    %c0_7 = arith.constant 0 : index
    %4 = vector.load %arg3[%c0_5, %c0_6, %c0_7] : memref<16x8x128xf32, #tpu.memory_space<vmem>>, vector<16x8x128xf32>
    tpu.vector_store %arg3[%c0_5, %c0_6, %c0_7], %3 {strides = array<i32>} : memref<16x8x128xf32, #tpu.memory_space<vmem>>, vector<16x8x128xf32>,
    return
  }
  func.func @transform_0(%arg0: i32) -> (i32, i32, i32) {
    %c0_i32 = arith.constant 0 : i32
    %c0_i32_0 = arith.constant 0 : i32
    %c0_i32_1 = arith.constant 0 : i32
    return %arg0, %c0_i32, %c0_i32_0 : i32, i32, i32
  }
  func.func @transform_1(%arg0: i32) -> (i32, i32, i32) {
    %c0_i32 = arith.constant 0 : i32
    %c0_i32_0 = arith.constant 0 : i32
    %c0_i32_1 = arith.constant 0 : i32
    return %arg0, %c0_i32, %c0_i32_0 : i32, i32, i32
  }
  func.func @transform_2(%arg0: i32) -> (i32, i32, i32) {
    %c0_i32 = arith.constant 0 : i32
    %c0_i32_0 = arith.constant 0 : i32
    %c0_i32_1 = arith.constant 0 : i32
    return %arg0, %c0_i32, %c0_i32_0 : i32, i32, i32
  }
}

</mosaic_0001>

<llo_original>
// kernel: tpu_custom_call.1
$region0: #{tpu_custom_call.1}
  #allocation0 [shape = 'u32[]', space=smem, size = 0x4, offset = 0x4, fixed_abs, tag = 'smem constant byte address 0x4 - core index']
  #allocation1 [shape = 'u32[144,128]{1,0:T(1,128)}', space=vmem, size = 0x12000, scoped, tag = 'internal scratch']
  %s0 = inlined_call_operand.hbm [shape: f32[32,8,128], index: 0, kind: input, shape index: {}]
  %s1 = inlined_call_operand.hbm [shape: f32[32,1,128], index: 1, kind: input, shape index: {}]
  %s2 = inlined_call_operand.hbm [shape: f32[32,8,128], index: 2, kind: output, shape index: {}]
  %s3 = sld [smem:[#allocation0]]
  $region49: #{tpu_custom_call.1} parent=0
    _
  %s5 = ssub.s32 1, %s3
  %s6 = scalar_select 0, %s5, %s3
  $region1: #{tpu_custom_call.1} parent=0
    #allocation2 [shape = 'u8[131072]{0}', space=vmem, size = 0x20000, scoped, tag = 'input window, operand 0']
    #allocation3 [shape = 's32[2]{0}', space=sflag, size = 0x8, scoped, tag = 'scoped memory for tpu_custom_call.1']
    #allocation4 [shape = 's32[2]{0}', space=sflag, size = 0x8, scoped, tag = 'scoped memory for tpu_custom_call.1']
    #allocation5 [shape = 'u8[16384]{0}', space=vmem, size = 0x4000, scoped, tag = 'input window, operand 1']
    #allocation6 [shape = 's32[2]{0}', space=sflag, size = 0x8, scoped, tag = 'scoped memory for tpu_custom_call.1']
    #allocation7 [shape = 'u8[131072]{0}', space=vmem, size = 0x20000, scoped, tag = 'output window, operand 0']
    %7 = vsyncpa [#allocation3], 0
    %s8 = scalar_lea.sflag [#allocation3], 1
    %9 = vsyncpa %s8, 0
    %10 = vsyncpa [#allocation6], 0
    %s11 = scalar_lea.sflag [#allocation6], 1
    %12 = vsyncpa %s11, 0
    %13 = vsyncpa [#allocation4], 0
    %s14 = scalar_lea.sflag [#allocation4], 1
    %15 = vsyncpa %s14, 0
    loop: start=0, step=1, limit=4
    $region2: #{tpu_custom_call.1} parent=1 // loop_pre_header
      _
    $region3: #{tpu_custom_call.1} parent=1 // loop_header
      %s17 = sphi 0, %s21
      %p18 = scmp.ge.s32.totalorder %s17, 4
      %s27 = sphi 0, %s29
      %s30 = sphi 0, %s27
      %s31 = sphi 0, %s30
      %s47 = sphi 0, %s31
      %s53 = sphi 0, %s55
      %s56 = sphi 0, %s53
      %s57 = sphi 0, %s56
      %s73 = sphi 0, %s57
      %s79 = sphi 0, %s81
      %s82 = sphi 0, %s79
      %s83 = sphi 0, %s82
      %s99 = sphi 0, %s83
    $region4: #{tpu_custom_call.1} parent=1 // loop_header_branch
      %20 = sbr.rel (%p18) target = $region8
    $region5: #{tpu_custom_call.1} parent=1 // loop_body
      %s22 = ssub.s32 %s17, 1
      %s23 = ssub.s32 %s17, 2
      %s24 = sadd.s32 %s17, 1
      %s25 = ssub.s32 %s17, %s24
      %p26 = scmp.eq.s32.totalorder %s25, 0
      %s28 = sadd.s32 %s27, 1
      %s29 = scalar_select %p26, %s27, %s28
      %p32 = pneg %p26
      %p33 = scmp.eq.s32.totalorder %s17, 1
      %p34 = por %p32, %p33
      %p35 = scmp.ne.s32.totalorder %s27, %s30
      %p36 = scmp.eq.s32.totalorder %s17, 0
      %p37 = por %p35, %p36
      %p38 = scmp.ne.s32.totalorder %s27, %s30
      %p39 = scmp.eq.s32.totalorder %s22, 1
      %p40 = por %p38, %p39
      %p41 = scmp.ne.s32.totalorder %s30, %s31
      %p42 = scmp.eq.s32.totalorder %s22, 0
      %p43 = por %p41, %p42
      %p44 = scmp.ne.s32.totalorder %s30, %s31
      %p45 = scmp.eq.s32.totalorder %s23, 1
      %p46 = por %p44, %p45
      %p48 = scmp.ne.s32.totalorder %s31, %s47
      %p49 = scmp.eq.s32.totalorder %s23, 0
      %p50 = por %p48, %p49
      %s51 = ssub.s32 %s17, %s24
      %p52 = scmp.eq.s32.totalorder %s51, 0
      %s54 = sadd.s32 %s53, 1
      %s55 = scalar_select %p52, %s53, %s54
      %p58 = pneg %p52
      %p59 = scmp.eq.s32.totalorder %s17, 1
      %p60 = por %p58, %p59
      %p61 = scmp.ne.s32.totalorder %s53, %s56
      %p62 = scmp.eq.s32.totalorder %s17, 0
      %p63 = por %p61, %p62
      %p64 = scmp.ne.s32.totalorder %s53, %s56
      %p65 = scmp.eq.s32.totalorder %s22, 1
      %p66 = por %p64, %p65
      %p67 = scmp.ne.s32.totalorder %s56, %s57
      %p68 = scmp.eq.s32.totalorder %s22, 0
      %p69 = por %p67, %p68
      %p70 = scmp.ne.s32.totalorder %s56, %s57
      %p71 = scmp.eq.s32.totalorder %s23, 1
      %p72 = por %p70, %p71
      %p74 = scmp.ne.s32.totalorder %s57, %s73
      %p75 = scmp.eq.s32.totalorder %s23, 0
      %p76 = por %p74, %p75
      %s77 = ssub.s32 %s17, %s24
      %p78 = scmp.eq.s32.totalorder %s77, 0
      %s80 = sadd.s32 %s79, 1
      %s81 = scalar_select %p78, %s79, %s80
      %p84 = pneg %p78
      %p85 = scmp.eq.s32.totalorder %s17, 1
      %p86 = por %p84, %p85
      %p87 = scmp.ne.s32.totalorder %s79, %s82
      %p88 = scmp.eq.s32.totalorder %s17, 0
      %p89 = por %p87, %p88
      %p90 = scmp.ne.s32.totalorder %s79, %s82
      %p91 = scmp.eq.s32.totalorder %s22, 1
      %p92 = por %p90, %p91
      %p93 = scmp.ne.s32.totalorder %s82, %s83
      %p94 = scmp.eq.s32.totalorder %s22, 0
      %p95 = por %p93, %p94
      %p96 = scmp.ne.s32.totalorder %s82, %s83
      %p97 = scmp.eq.s32.totalorder %s23, 1
      %p98 = por %p96, %p97
      %p100 = scmp.ne.s32.totalorder %s83, %s99
      %p101 = scmp.eq.s32.totalorder %s23, 0
      %p102 = por %p100, %p101
      %p103 = scmp.le.s32.totalorder 1, %s17
      %p104 = scmp.lt.s32.totalorder %s17, 3
      %p105 = pnand %p103, %p104
      %p106 = pneg %p105
      // Predicated region
      $region9: #{tpu_custom_call.1} parent=5 // pred_check
        _
      $region10: #{tpu_custom_call.1} parent=5 // pred_check_branch
        %108 = sbr.rel (%p105) target = $region12
      $region11: #{tpu_custom_call.1} parent=5 // pred_region
        %s109 = ssub.s32 %s17, 1
      $region12: #{tpu_custom_call.1} parent=5 // pred_fallthru
        _
      %p110 = scmp.lt.s32.totalorder %s17, 2
      // Predicated region
      $region13: #{tpu_custom_call.1} parent=5 // pred_check
        %p111 = pneg %p110
      $region14: #{tpu_custom_call.1} parent=5 // pred_check_branch
        %113 = sbr.rel (%p111) target = $region16
      $region15: #{tpu_custom_call.1} parent=5 // pred_region
        // Predicated region
        $region17: #{tpu_custom_call.1} parent=15 // pred_check
          %p114 = pneg %p37
        $region18: #{tpu_custom_call.1} parent=15 // pred_check_branch
          %116 = sbr.rel (%p114) target = $region20
        $region19: #{tpu_custom_call.1} parent=15 // pred_region
          %s117 = sand.u32 %s27, 1
          %s118 = scalar_lea.sflag [#allocation3], %s117
          %s119 = sand.u32 %s27, 1
          %s120 = smul.addr %s119, 128
          %s121 = scalar_lea.vmem [#allocation2], %s120
          %s122 = smul.u32 16, %s17
          %s124 = ssub.s32 2048, 2048
          %125 = vsyncadd %s118, %s124
          %s126 = smul.addr %s122, 128
          %s127 = scalar_lea.hbm %s0, %s126
          %s128 = sshll.u32 %s121, 4
          %s129 = int_to_ptr.vmem [resolvable:$true] %s128
          %134 = dma.hbm_to_vmem [thread:$0]  %s127, 2048, %s129, %s118, 128, 128, 8
        $region20: #{tpu_custom_call.1} parent=15 // pred_fallthru
          _
        // Predicated region
        $region21: #{tpu_custom_call.1} parent=15 // pred_check
          %p135 = pneg %p63
        $region22: #{tpu_custom_call.1} parent=15 // pred_check_branch
          %137 = sbr.rel (%p135) target = $region24
        $region23: #{tpu_custom_call.1} parent=15 // pred_region
          %s138 = sand.u32 %s53, 1
          %s139 = scalar_lea.sflag [#allocation6], %s138
          %s140 = sand.u32 %s53, 1
          %s141 = smul.addr %s140, 16
          %s142 = scalar_lea.vmem [#allocation5], %s141
          %s143 = smul.u32 16, %s17
          %s145 = ssub.s32 256, 256
          %146 = vsyncadd %s139, %s145
          %s147 = smul.addr %s143, 16
          %s148 = scalar_lea.hbm %s1, %s147
          %s149 = sshll.u32 %s142, 4
          %s150 = int_to_ptr.vmem [resolvable:$true] %s149
          %155 = dma.hbm_to_vmem [thread:$0]  %s148, 256, %s150, %s139, 16, 16, 1
        $region24: #{tpu_custom_call.1} parent=15 // pred_fallthru
          _
      $region16: #{tpu_custom_call.1} parent=5 // pred_fallthru
        _
      %p156 = scmp.le.s32.totalorder 1, %s17
      %p157 = scmp.lt.s32.totalorder %s17, 3
      %p158 = pnand %p156, %p157
      %p159 = pneg %p158
      // Predicated region
      $region25: #{tpu_custom_call.1} parent=5 // pred_check
        _
      $region26: #{tpu_custom_call.1} parent=5 // pred_check_branch
        %161 = sbr.rel (%p158) target = $region28
      $region27: #{tpu_custom_call.1} parent=5 // pred_region
        %s162 = ssub.s32 %s17, 1
        %s163 = sand.u32 %s30, 1
        %s164 = scalar_lea.sflag [#allocation3], %s163
        %s165 = sand.u32 %s30, 1
        %s166 = smul.addr %s165, 128
        %s167 = scalar_lea.vmem [#allocation2], %s166
        // Predicated region
        $region29: #{tpu_custom_call.1} parent=27 // pred_check
          %p168 = pneg %p43
        $region30: #{tpu_custom_call.1} parent=27 // pred_check_branch
          %170 = sbr.rel (%p168) target = $region32
        $region31: #{tpu_custom_call.1} parent=27 // pred_region
          %171 = dma.done %s164, 2048
        $region32: #{tpu_custom_call.1} parent=27 // pred_fallthru
          _
        %s172 = sand.u32 %s56, 1
        %s173 = scalar_lea.sflag [#allocation6], %s172
        %s174 = sand.u32 %s56, 1
        %s175 = smul.addr %s174, 16
        %s176 = scalar_lea.vmem [#allocation5], %s175
        // Predicated region
        $region33: #{tpu_custom_call.1} parent=27 // pred_check
          %p177 = pneg %p69
        $region34: #{tpu_custom_call.1} parent=27 // pred_check_branch
          %179 = sbr.rel (%p177) target = $region36
        $region35: #{tpu_custom_call.1} parent=27 // pred_region
          %180 = dma.done %s173, 256
        $region36: #{tpu_custom_call.1} parent=27 // pred_fallthru
          _
        %s181 = sand.u32 %s30, 1
        %s182 = scalar_lea.sflag [#allocation3], %s181
        %s183 = sand.u32 %s30, 1
        %s184 = smul.addr %s183, 128
        %s185 = scalar_lea.vmem [#allocation2], %s184
        %p186 = pneg %p43
        %p187 = pneg %p40
        %s188 = sand.u32 %s56, 1
        %s189 = scalar_lea.sflag [#allocation6], %s188
        %s190 = sand.u32 %s56, 1
        %s191 = smul.addr %s190, 16
        %s192 = scalar_lea.vmem [#allocation5], %s191
        %p193 = pneg %p69
        %p194 = pneg %p66
        %p195 = pneg %p95
        %p196 = pneg %p92
        %s197 = sand.u32 %s82, 1
        %s198 = scalar_lea.sflag [#allocation4], %s197
        %s199 = sand.u32 %s82, 1
        %s200 = smul.addr %s199, 128
        %s201 = scalar_lea.vmem [#allocation7], %s200
        %s202 = smul.u32 16, %s22
        %s203 = smul.u32 16, %s22
        %s204 = smul.u32 16, %s22
        %v205 = vld [vmem:[%s167] sm:$0xff]
        %v206 = vld [vmem:[%s167 + $0x8] sm:$0xff]
        %v207 = vld [vmem:[%s167 + $0x10] sm:$0xff]
        %v208 = vld [vmem:[%s167 + $0x18] sm:$0xff]
        %v209 = vld [vmem:[%s167 + $0x20] sm:$0xff]
        %v210 = vld [vmem:[%s167 + $0x28] sm:$0xff]
        %v211 = vld [vmem:[%s167 + $0x30] sm:$0xff]
        %v212 = vld [vmem:[%s167 + $0x38] sm:$0xff]
        %v213 = vld [vmem:[%s167 + $0x40] sm:$0xff]
        %v214 = vld [vmem:[%s167 + $0x48] sm:$0xff]
        %v215 = vld [vmem:[%s167 + $0x50] sm:$0xff]
        %v216 = vld [vmem:[%s167 + $0x58] sm:$0xff]
        %v217 = vld [vmem:[%s167 + $0x60] sm:$0xff]
        %v218 = vld [vmem:[%s167 + $0x68] sm:$0xff]
        %v219 = vld [vmem:[%s167 + $0x70] sm:$0xff]
        %v220 = vld [vmem:[%s167 + $0x78] sm:$0xff]
        %v221 = vld [vmem:[%s176] sm:$0x1]
        %v222 = vld [vmem:[%s176 + $0x1] sm:$0x1]
        %v223 = vld [vmem:[%s176 + $0x2] sm:$0x1]
        %v224 = vld [vmem:[%s176 + $0x3] sm:$0x1]
        %v225 = vld [vmem:[%s176 + $0x4] sm:$0x1]
        %v226 = vld [vmem:[%s176 + $0x5] sm:$0x1]
        %v227 = vld [vmem:[%s176 + $0x6] sm:$0x1]
        %v228 = vld [vmem:[%s176 + $0x7] sm:$0x1]
        %v229 = vld [vmem:[%s176 + $0x8] sm:$0x1]
        %v230 = vld [vmem:[%s176 + $0x9] sm:$0x1]
        %v231 = vld [vmem:[%s176 + $0xa] sm:$0x1]
        %v232 = vld [vmem:[%s176 + $0xb] sm:$0x1]
        %v233 = vld [vmem:[%s176 + $0xc] sm:$0x1]
        %v234 = vld [vmem:[%s176 + $0xd] sm:$0x1]
        %v235 = vld [vmem:[%s176 + $0xe] sm:$0x1]
        %v236 = vld [vmem:[%s176 + $0xf] sm:$0x1]
        %v253 = vlaneseq
        %v254 = vshrl.u32 %v253, 7
        %v255 = vsub.s32 0, %v254
        %v256 = vrot.slane %v221, %v255
        %v257 = vlaneseq
        %v258 = vshrl.u32 %v257, 7
        %v259 = vsub.s32 0, %v258
        %v260 = vrot.slane %v222, %v259
        %v261 = vlaneseq
        %v262 = vshrl.u32 %v261, 7
        %v263 = vsub.s32 0, %v262
        %v264 = vrot.slane %v223, %v263
        %v265 = vlaneseq
        %v266 = vshrl.u32 %v265, 7
        %v267 = vsub.s32 0, %v266
        %v268 = vrot.slane %v224, %v267
        %v269 = vlaneseq
        %v270 = vshrl.u32 %v269, 7
        %v271 = vsub.s32 0, %v270
        %v272 = vrot.slane %v225, %v271
        %v273 = vlaneseq
        %v274 = vshrl.u32 %v273, 7
        %v275 = vsub.s32 0, %v274
        %v276 = vrot.slane %v226, %v275
        %v277 = vlaneseq
        %v278 = vshrl.u32 %v277, 7
        %v279 = vsub.s32 0, %v278
        %v280 = vrot.slane %v227, %v279
        %v281 = vlaneseq
        %v282 = vshrl.u32 %v281, 7
        %v283 = vsub.s32 0, %v282
        %v284 = vrot.slane %v228, %v283
        %v285 = vlaneseq
        %v286 = vshrl.u32 %v285, 7
        %v287 = vsub.s32 0, %v286
        %v288 = vrot.slane %v229, %v287
        %v289 = vlaneseq
        %v290 = vshrl.u32 %v289, 7
        %v291 = vsub.s32 0, %v290
        %v292 = vrot.slane %v230, %v291
        %v293 = vlaneseq
        %v294 = vshrl.u32 %v293, 7
        %v295 = vsub.s32 0, %v294
        %v296 = vrot.slane %v231, %v295
        %v297 = vlaneseq
        %v298 = vshrl.u32 %v297, 7
        %v299 = vsub.s32 0, %v298
        %v300 = vrot.slane %v232, %v299
        %v301 = vlaneseq
        %v302 = vshrl.u32 %v301, 7
        %v303 = vsub.s32 0, %v302
        %v304 = vrot.slane %v233, %v303
        %v305 = vlaneseq
        %v306 = vshrl.u32 %v305, 7
        %v307 = vsub.s32 0, %v306
        %v308 = vrot.slane %v234, %v307
        %v309 = vlaneseq
        %v310 = vshrl.u32 %v309, 7
        %v311 = vsub.s32 0, %v310
        %v312 = vrot.slane %v235, %v311
        %v313 = vlaneseq
        %v314 = vshrl.u32 %v313, 7
        %v315 = vsub.s32 0, %v314
        %v316 = vrot.slane %v236, %v315
        %v333 = vadd.f32 %v205, %v256
        %v334 = vadd.f32 %v206, %v260
        %v335 = vadd.f32 %v207, %v264
        %v336 = vadd.f32 %v208, %v268
        %v337 = vadd.f32 %v209, %v272
        %v338 = vadd.f32 %v210, %v276
        %v339 = vadd.f32 %v211, %v280
        %v340 = vadd.f32 %v212, %v284
        %v341 = vadd.f32 %v213, %v288
        %v342 = vadd.f32 %v214, %v292
        %v343 = vadd.f32 %v215, %v296
        %v344 = vadd.f32 %v216, %v300
        %v345 = vadd.f32 %v217, %v304
        %v346 = vadd.f32 %v218, %v308
        %v347 = vadd.f32 %v219, %v312
        %v348 = vadd.f32 %v220, %v316
        %349 = vst [vmem:[%s201] sm:$0xff] %v333
        %350 = vst [vmem:[%s201 + $0x8] sm:$0xff] %v334
        %351 = vst [vmem:[%s201 + $0x10] sm:$0xff] %v335
        %352 = vst [vmem:[%s201 + $0x18] sm:$0xff] %v336
        %353 = vst [vmem:[%s201 + $0x20] sm:$0xff] %v337
        %354 = vst [vmem:[%s201 + $0x28] sm:$0xff] %v338
        %355 = vst [vmem:[%s201 + $0x30] sm:$0xff] %v339
        %356 = vst [vmem:[%s201 + $0x38] sm:$0xff] %v340
        %357 = vst [vmem:[%s201 + $0x40] sm:$0xff] %v341
        %358 = vst [vmem:[%s201 + $0x48] sm:$0xff] %v342
        %359 = vst [vmem:[%s201 + $0x50] sm:$0xff] %v343
        %360 = vst [vmem:[%s201 + $0x58] sm:$0xff] %v344
        %361 = vst [vmem:[%s201 + $0x60] sm:$0xff] %v345
        %362 = vst [vmem:[%s201 + $0x68] sm:$0xff] %v346
        %363 = vst [vmem:[%s201 + $0x70] sm:$0xff] %v347
        %364 = vst [vmem:[%s201 + $0x78] sm:$0xff] %v348
        %s365 = sand.u32 %s82, 1
        %s366 = scalar_lea.sflag [#allocation4], %s365
        %s367 = sand.u32 %s82, 1
        %s368 = smul.addr %s367, 128
        %s369 = scalar_lea.vmem [#allocation7], %s368
        // Predicated region
        $region37: #{tpu_custom_call.1} parent=27 // pred_check
          %p370 = pneg %p92
        $region38: #{tpu_custom_call.1} parent=27 // pred_check_branch
          %372 = sbr.rel (%p370) target = $region40
        $region39: #{tpu_custom_call.1} parent=27 // pred_region
          %s373 = smul.u32 16, %s22
          %s375 = ssub.s32 2048, 2048
          %376 = vsyncadd %s366, %s375
          %s377 = smul.addr %s373, 128
          %s378 = scalar_lea.hbm %s2, %s377
          %s379 = sshll.u32 %s369, 4
          %s380 = int_to_ptr.vmem [resolvable:$true] %s379
          %385 = dma.vmem_to_hbm [thread:$0]  %s380, 2048, %s378, %s366, 128, 128, 8
        $region40: #{tpu_custom_call.1} parent=27 // pred_fallthru
          _
      $region28: #{tpu_custom_call.1} parent=5 // pred_fallthru
        _
      %p386 = scmp.le.s32.totalorder 2, %s17
      // Predicated region
      $region41: #{tpu_custom_call.1} parent=5 // pred_check
        %p387 = pneg %p386
      $region42: #{tpu_custom_call.1} parent=5 // pred_check_branch
        %389 = sbr.rel (%p387) target = $region44
      $region43: #{tpu_custom_call.1} parent=5 // pred_region
        %s390 = ssub.s32 %s17, 2
        // Predicated region
        $region45: #{tpu_custom_call.1} parent=43 // pred_check
          %p391 = pneg %p98
        $region46: #{tpu_custom_call.1} parent=43 // pred_check_branch
          %393 = sbr.rel (%p391) target = $region48
        $region47: #{tpu_custom_call.1} parent=43 // pred_region
          %s394 = sand.u32 %s83, 1
          %s395 = scalar_lea.sflag [#allocation4], %s394
          %s396 = sand.u32 %s83, 1
          %s397 = smul.addr %s396, 128
          %s398 = scalar_lea.vmem [#allocation7], %s397
          %399 = dma.done %s395, 2048
        $region48: #{tpu_custom_call.1} parent=43 // pred_fallthru
          _
      $region44: #{tpu_custom_call.1} parent=5 // pred_fallthru
        _
    $region6: #{tpu_custom_call.1} parent=1 // loop_footer
      %s21 = sadd.s32 1, %s17
    $region7: #{tpu_custom_call.1} parent=1 // loop_footer_branch
      %16 = sbr.rel target = $region3
    $region8: #{tpu_custom_call.1} parent=1 // loop_exit
      _
    %400 = vsyncpa [#allocation3], 1
    %s401 = scalar_lea.sflag [#allocation3], 1
    %402 = vsyncpa %s401, 1
    %403 = vsyncpa [#allocation6], 1
    %s404 = scalar_lea.sflag [#allocation6], 1
    %405 = vsyncpa %s404, 1
    %406 = vsyncpa [#allocation4], 1
    %s407 = scalar_lea.sflag [#allocation4], 1
    %408 = vsyncpa %s407, 1

</llo_original>
